<compile_context>
chip_gen: v7x
topology: tpu7x:2x2x1
jax: 0.10.0
libtpu: 0.0.40
codegen_flags: <defaults>
</compile_context>

<pallas_src>
import jax
import jax.numpy as jnp
from jax.experimental import pallas as pl
from jax.experimental.pallas import tpu as pltpu

EPS = 1e-3   # dice smoothing (assumed, see TODO above)
LANES = 128

_PARALLEL = getattr(pltpu, "PARALLEL", "parallel")
_ARBITRARY = getattr(pltpu, "ARBITRARY", "arbitrary")
_CORE_PARALLEL = getattr(pltpu, "CORE_PARALLEL", None)


def hover_loss_kernel(np_x_ref, np_t_ref, hv_x_ref, hv_t_ref, nc_x_ref, nc_t_ref,
                      out_ref):
    """Accumulates (8,128)-aligned partial sums of all HoverLoss reduction statistics.

    out_ref block (1, NQ, 8, 128), NQ = 5 + 2*C:
      0            bce-with-logits sum
      1            sum(sigmoid * t)                  (NP dice intersection)
      2            sum(sigmoid + t)                  (NP dice denominator, merged)
      3            squared-error sum                 (HV MSE)
      4            cross-entropy sum
      5 + c        per-class sum(prob_c | cls==c)    (NC dice intersection)
      5 + C + c    per-class sum(prob_c + onehot_c)  (NC dice denominator, merged)
    """
    C = nc_x_ref.shape[1]
    tm = np_x_ref.shape[1]
    aligned = (tm % 8 == 0)                               # static

    @pl.when(pl.program_id(1) == 0)
    def _init():
        out_ref[...] = jnp.zeros_like(out_ref)

    def acc(q, x2d):
        if aligned:
            # vreg-wise reduce (tm,128)->(8,128): full-vreg vadds + aligned store.
            out_ref[0, q] += jnp.sum(x2d.reshape(tm // 8, 8, LANES), axis=0)
        else:
            # Rare tiny-tile fallback (tm not a multiple of 8): single-row RMW.
            out_ref[0, q, 0:1, :] += jnp.sum(x2d, axis=0, keepdims=True)

    # ---------------- NP branch: BCE-with-logits + sigmoid-dice sums ------------
    x = np_x_ref[0].astype(jnp.float32)                   # (tm, 128)
    t = np_t_ref[0].astype(jnp.float32)
    e = jnp.exp(-jnp.abs(x))                               # shared transcendental
    bce = jnp.maximum(x, 0.0) - x * t + jnp.log1p(e)       # stable BCE-with-logits
    p = jnp.where(x >= 0.0, 1.0, e) / (1.0 + e)            # exact sigmoid (div is free; HBM-bound)
    acc(0, bce)
    acc(1, p * t)
    acc(2, p + t)                                          # merged dice denominator

    # ---------------- HV branch: MSE sum ----------------------------------------
    d = hv_x_ref[0].astype(jnp.float32) - hv_t_ref[0].astype(jnp.float32)  # (Chv, tm, 128)
    acc(3, jnp.sum(d * d, axis=0))

    # ---------------- NC branch: CE + softmax-dice, unrolled over classes -------
    cls = nc_t_ref[0]                                      # (tm, 128) ints
    zs = [nc_x_ref[0, c].astype(jnp.float32) for c in range(C)]
    m = zs[0]
    for c in range(1, C):
        m = jnp.maximum(m, zs[c])
    es = [jnp.exp(zs[c] - m) for c in range(C)]
    s = es[0]
    for c in range(1, C):
        s = s + es[c]
    inv_s = 1.0 / s                                        # exact
    lse = jnp.log(s) + m                                   # logsumexp per pixel
    eqs = [cls == c for c in range(C)]                     # hoisted, reused below
    picked = jnp.where(eqs[0], zs[0], 0.0)
    for c in range(1, C):
        picked = picked + jnp.where(eqs[c], zs[c], 0.0)
    acc(4, lse - picked)                                   # per-pixel CE
    for c in range(C):
        prob_c = es[c] * inv_s
        one_c = eqs[c].astype(jnp.float32)
        acc(5 + c, jnp.where(eqs[c], prob_c, 0.0))         # intersection (no extra mul)
        acc(5 + C + c, prob_c + one_c)                     # merged dice denominator


# -------------------------- wrapper-side helpers --------------------------------

def _pick_tile_rows(rows, target):
    """Largest divisor of `rows` that is a multiple of 8 and <= target; else `rows`
    itself (block dim == full array dim satisfies the (8,128) layout rule)."""
    for tm in range(min(target, rows), 0, -1):
        if rows % tm == 0 and tm % 8 == 0:
            return tm
    # TODO(synk): pathological H*W (no multiple-of-8 divisor near target) would
    # benefit from a padded + masked tail tile instead of the full-row fallback.
    return rows


def _tpu_info():
    try:
        return pltpu.get_tpu_info()
    except Exception:
        return None


def _vmem_capacity_bytes():
    info = _tpu_info()
    cap = getattr(info, "vmem_capacity_bytes", None) if info is not None else None
    try:
        cap = int(cap) if cap else 0
    except Exception:
        cap = 0
    return cap if cap > 0 else (64 << 20)      # conservative (v7x-sized) default


def _num_tensorcores():
    info = _tpu_info()
    if info is not None:
        for name in ("num_cores", "core_count", "num_tensorcores", "num_tensor_cores",
                     "tensor_core_count"):
            n = getattr(info, name, None)
            if isinstance(n, int) and n > 0:
                return n
    return 1


def hover_loss(np_logits, np_targets, hv_logits, hv_targets, nc_logits, nc_targets,
               *, target_rows=None, buffer_depth=2):
    B, _, H, W = np_logits.shape
    C = nc_logits.shape[1]
    Chv = hv_logits.shape[1]
    HW = H * W
    assert HW % LANES == 0, "H*W must be a multiple of 128"
    R = HW // LANES
    NQ = 5 + 2 * C

    # ---- tile sizing / VMEM budget (counts streamed inputs AND softmax temporaries)
    vmem_cap = _vmem_capacity_bytes()
    if target_rows is None:
        target_rows = 1024 if vmem_cap >= (100 << 20) else 512   # v5e/v6e vs v7x

    tm = _pick_tile_rows(R, target_rows)

    def _need(tm_):
        per_buf = tm_ * LANES * 4 * (3 + 2 * Chv + C)   # streamed input blocks / step
        tmp = (2 * C + 8) * tm_ * LANES * 4             # unrolled-softmax temporaries
        return 2 * per_buf + tmp + NQ * 8 * LANES * 4 + (2 << 20)

    budget = int(0.70 * vmem_cap)
    while _need(tm) > budget and tm > 8:
        smaller = _pick_tile_rows(R, max(8, tm // 2))
        if smaller >= tm:
            break
        tm = smaller
    T = R // tm
    vmem_limit = int(min(int(0.85 * vmem_cap), max(32 << 20, int(1.5 * _need(tm)))))

    # ---- free reshapes only; no wrapper-side transpose/astype (kernel casts in-VMEM,
    # so callers may pass uint8/int8 targets or bf16 logits to cut HBM bytes).
    np_x = np_logits.reshape(B, R, LANES)
    np_t = np_targets.reshape(B, R, LANES)
    hv_x = hv_logits.reshape(B, Chv, R, LANES)
    hv_t = hv_targets.reshape(B, Chv, R, LANES)
    nc_x = nc_logits.reshape(B, C, R, LANES)            # channels-first, lane-dense
    nc_t = nc_targets.reshape(B, R, LANES)               # lane-dense int class ids

    deep = None
    if buffer_depth and buffer_depth > 2 and hasattr(pl, "Buffered"):
        deep = pl.Buffered(int(buffer_depth))            # optional: hide bursty DMA gaps

    def _spec(block, idx, buffered=False):
        if buffered and deep is not None:
            return pl.BlockSpec(block, idx, pipeline_mode=deep)
        return pl.BlockSpec(block, idx)

    in_specs = [
        _spec((1, tm, LANES), lambda b, i: (b, i, 0)),                         # NP logits
        _spec((1, tm, LANES), lambda b, i: (b, i, 0)),                         # NP targets
        _spec((1, Chv, tm, LANES), lambda b, i: (b, 0, i, 0), buffered=True),  # HV logits
        _spec((1, Chv, tm, LANES), lambda b, i: (b, 0, i, 0), buffered=True),  # HV targets
        _spec((1, C, tm, LANES), lambda b, i: (b, 0, i, 0), buffered=True),    # NC logits
        _spec((1, tm, LANES), lambda b, i: (b, i, 0)),                         # NC targets
    ]
    out_spec = pl.BlockSpec((1, NQ, 8, LANES), lambda b, i: (b, 0, 0, 0))

    # ---- v7x: shard the batch axis across both TensorCores (per-b accumulators,
    # so no cross-core reduction is needed).  Safe fallback to PARALLEL elsewhere.
    ncores = _num_tensorcores()
    lead_sem = _PARALLEL
    if _CORE_PARALLEL is not None and ncores > 1 and B % ncores == 0:
        lead_sem = _CORE_PARALLEL

    def _call(lead):
        return pl.pallas_call(
            hover_loss_kernel,
            grid=(B, T),
            in_specs=in_specs,
            out_specs=out_spec,
            out_shape=jax.ShapeDtypeStruct((B, NQ, 8, LANES), jnp.float32),
            compiler_params=pltpu.CompilerParams(
                dimension_semantics=(lead, _ARBITRARY),
                vmem_limit_bytes=vmem_limit),
        )(np_x, np_t, hv_x, hv_t, nc_x, nc_t)

    try:
        out = _call(lead_sem)
    except Exception:
        if lead_sem is _PARALLEL:
            raise
        out = _call(_PARALLEL)   # CORE_PARALLEL unsupported on this part: safe fallback

    # ------ tiny scalar glue: cross-batch/sublane/lane reduce, means, dice, combine
    sums = jnp.sum(out, axis=(0, 2, 3))                  # (NQ,)
    bce_s, np_i, np_d, mse_s, ce_s = (sums[k] for k in range(5))
    nc_i = sums[5:5 + C]
    nc_d = sums[5 + C:5 + 2 * C]

    n_pix = B * HW
    bce = bce_s / n_pix                                  # BCEWithLogitsLoss (mean)
    dice_np = 1.0 - (2.0 * np_i + EPS) / (np_d + EPS)    # DiceLoss on sigmoid
    np_loss = bce + dice_np                              # CombinedLoss = sum

    hv_loss = mse_s / (B * Chv * HW)                     # MSELoss (mean)

    ce = ce_s / n_pix                                    # CrossEntropyLoss (mean)
    dice_nc = 1.0 - jnp.mean((2.0 * nc_i + EPS) / (nc_d + EPS))
    nc_loss = ce + dice_nc

    return np_loss + hv_loss + nc_loss


def hover_loss_ref(np_logits, np_targets, hv_logits, hv_targets, nc_logits, nc_targets):
    """Pure-JAX reference for correctness checking."""
    x = np_logits.astype(jnp.float32)
    t = np_targets.astype(jnp.float32)
    bce = jnp.mean(jnp.maximum(x, 0.0) - x * t + jnp.log1p(jnp.exp(-jnp.abs(x))))
    p = jax.nn.sigmoid(x)
    dice_np = 1.0 - (2.0 * jnp.sum(p * t) + EPS) / (jnp.sum(p) + jnp.sum(t) + EPS)
    mse = jnp.mean((hv_logits.astype(jnp.float32) - hv_targets.astype(jnp.float32)) ** 2)
    z = jnp.transpose(nc_logits, (0, 2, 3, 1)).astype(jnp.float32)   # B,H,W,C
    logp = jax.nn.log_softmax(z, axis=-1)
    onehot = jax.nn.one_hot(nc_targets, nc_logits.shape[1], dtype=jnp.float32)
    ce = -jnp.mean(jnp.sum(logp * onehot, axis=-1))
    probs = jax.nn.softmax(z, axis=-1)
    inter = jnp.sum(probs * onehot, axis=(0, 1, 2))
    card = jnp.sum(probs, axis=(0, 1, 2)) + jnp.sum(onehot, axis=(0, 1, 2))
    dice_nc = 1.0 - jnp.mean((2.0 * inter + EPS) / (card + EPS))
    return (bce + dice_np) + mse + (ce + dice_nc)


if __name__ == "__main__":
    B, C, H, W = 2, 4, 32, 32
    key = jax.random.PRNGKey(0)
    k1, k2, k3, k4, k5, k6 = jax.random.split(key, 6)

    np_logits = jax.random.normal(k1, (B, 1, H, W), jnp.float32)
    np_targets = jax.random.bernoulli(k2, 0.4, (B, 1, H, W)).astype(jnp.float32)
    hv_logits = jax.random.normal(k3, (B, 2, H, W), jnp.float32)
    hv_targets = jax.random.uniform(k4, (B, 2, H, W), jnp.float32, -1.0, 1.0)
    nc_logits = jax.random.normal(k5, (B, C, H, W), jnp.float32)
    nc_targets = jax.random.randint(k6, (B, H, W), 0, C, jnp.int32)

    loss = hover_loss(np_logits, np_targets, hv_logits, hv_targets, nc_logits, nc_targets)
    loss = jax.block_until_ready(loss)

    ref = hover_loss_ref(np_logits, np_targets, hv_logits, hv_targets, nc_logits, nc_targets)
    assert jnp.isfinite(loss), "non-finite loss"
    # exact reciprocals in-kernel now -> tight tolerance (f32 summation-order noise only)
    assert jnp.allclose(loss, ref, rtol=1e-4, atol=1e-5), (loss, ref)
    print("KERNEL_OK")
</pallas_src>

<mosaic_0001>
module attributes {stable_mosaic.version = 11 : i64} {
  func.func @hover_loss_kernel(%arg0: i32, %arg1: i32, %arg2: memref<1x8x128xf32, #tpu.memory_space<vmem>>, %arg3: memref<1x8x128xf32, #tpu.memory_space<vmem>>, %arg4: memref<1x2x8x128xf32, #tpu.memory_space<vmem>>, %arg5: memref<1x2x8x128xf32, #tpu.memory_space<vmem>>, %arg6: memref<1x4x8x128xf32, #tpu.memory_space<vmem>>, %arg7: memref<1x8x128xi32, #tpu.memory_space<vmem>>, %arg8: memref<1x13x8x128xf32, #tpu.memory_space<vmem>>) attributes {dimension_semantics = [#tpu.dimension_semantics<parallel>, #tpu.dimension_semantics<arbitrary>], iteration_bounds = array<i64: 2, 1>, scalar_prefetch = 0 : i64, scratch_operands = 0 : i64, tpu.core_type = #tpu.core_type<tc>, window_params = [{transform_indices = @transform_0, window_bounds = array<i64: 1, 8, 128>}, {transform_indices = @transform_1, window_bounds = array<i64: 1, 8, 128>}, {transform_indices = @transform_2, window_bounds = array<i64: 1, 2, 8, 128>}, {transform_indices = @transform_3, window_bounds = array<i64: 1, 2, 8, 128>}, {transform_indices = @transform_4, window_bounds = array<i64: 1, 4, 8, 128>}, {transform_indices = @transform_5, window_bounds = array<i64: 1, 8, 128>}, {transform_indices = @transform_6, window_bounds = array<i64: 1, 13, 8, 128>}]} {
    %c0_i32 = arith.constant 0 : i32
    %0 = arith.cmpi eq, %arg1, %c0_i32 : i32
    %1 = arith.extui %0 : i1 to i32
    %c0_i32_0 = arith.constant 0 : i32
    %2 = arith.cmpi ne, %1, %c0_i32_0 : i32
    scf.if %2 {
      %cst_153 = arith.constant 0.000000e+00 : f32
      %209 = vector.broadcast %cst_153 : f32 to vector<1x13x8x128xf32>
      %c0_154 = arith.constant 0 : index
      %c0_155 = arith.constant 0 : index
      %c0_156 = arith.constant 0 : index
      %c0_157 = arith.constant 0 : index
      %210 = vector.load %arg8[%c0_154, %c0_155, %c0_156, %c0_157] : memref<1x13x8x128xf32, #tpu.memory_space<vmem>>, vector<1x13x8x128xf32>
      tpu.vector_store %arg8[%c0_154, %c0_155, %c0_156, %c0_157], %209 {strides = array<i32>} : memref<1x13x8x128xf32, #tpu.memory_space<vmem>>, vector<1x13x8x128xf32>,
    } else {
    }
    %c0 = arith.constant 0 : index
    %c0_1 = arith.constant 0 : index
    %c0_2 = arith.constant 0 : index
    %3 = vector.load %arg2[%c0, %c0_1, %c0_2] : memref<1x8x128xf32, #tpu.memory_space<vmem>>, vector<1x8x128xf32>
    %4 = vector.shape_cast %3 : vector<1x8x128xf32> to vector<8x128xf32>
    %c0_3 = arith.constant 0 : index
    %c0_4 = arith.constant 0 : index
    %c0_5 = arith.constant 0 : index
    %5 = vector.load %arg3[%c0_3, %c0_4, %c0_5] : memref<1x8x128xf32, #tpu.memory_space<vmem>>, vector<1x8x128xf32>
    %6 = vector.shape_cast %5 : vector<1x8x128xf32> to vector<8x128xf32>
    %7 = math.absf %4 : vector<8x128xf32>
    %cst = arith.constant 0.000000e+00 : f32
    %8 = vector.broadcast %cst : f32 to vector<8x128xf32>
    %9 = arith.subf %8, %7 : vector<8x128xf32>
    %10 = math.exp %9 : vector<8x128xf32>
    %cst_6 = arith.constant 0.000000e+00 : f32
    %11 = vector.broadcast %cst_6 : f32 to vector<8x128xf32>
    %12 = arith.maximumf %4, %11 : vector<8x128xf32>
    %13 = arith.mulf %4, %6 : vector<8x128xf32>
    %14 = arith.subf %12, %13 : vector<8x128xf32>
    %15 = math.log1p %10 : vector<8x128xf32>
    %16 = arith.addf %14, %15 : vector<8x128xf32>
    %cst_7 = arith.constant 0.000000e+00 : f32
    %17 = vector.broadcast %cst_7 : f32 to vector<8x128xf32>
    %18 = arith.cmpf oge, %4, %17 : vector<8x128xf32>
    %cst_8 = arith.constant 1.000000e+00 : f32
    %19 = vector.broadcast %cst_8 : f32 to vector<8x128xf32>
    %20 = arith.select %18, %19, %10 : vector<8x128xi1>, vector<8x128xf32>
    %cst_9 = arith.constant 1.000000e+00 : f32
    %21 = vector.broadcast %cst_9 : f32 to vector<8x128xf32>
    %22 = arith.addf %21, %10 : vector<8x128xf32>
    %23 = arith.divf %20, %22 : vector<8x128xf32>
    %c0_10 = arith.constant 0 : index
    %c0_11 = arith.constant 0 : index
    %c0_12 = arith.constant 0 : index
    %c0_13 = arith.constant 0 : index
    %24 = vector.load %arg8[%c0_10, %c0_11, %c0_12, %c0_13] : memref<1x13x8x128xf32, #tpu.memory_space<vmem>>, vector<1x1x8x128xf32>
    %25 = vector.shape_cast %24 : vector<1x1x8x128xf32> to vector<8x128xf32>
    %26 = vector.shape_cast %16 : vector<8x128xf32> to vector<1x8x128xf32>
    %cst_14 = arith.constant dense<0.000000e+00> : vector<8x128xf32>
    %27 = vector.multi_reduction <add>, %26, %cst_14 [0] : vector<1x8x128xf32> to vector<8x128xf32>
    %28 = arith.addf %25, %27 : vector<8x128xf32>
    %c0_15 = arith.constant 0 : index
    %c0_16 = arith.constant 0 : index
    %c0_17 = arith.constant 0 : index
    %c0_18 = arith.constant 0 : index
    %29 = vector.load %arg8[%c0_15, %c0_16, %c0_17, %c0_18] : memref<1x13x8x128xf32, #tpu.memory_space<vmem>>, vector<1x1x8x128xf32>
    %30 = vector.shape_cast %29 : vector<1x1x8x128xf32> to vector<8x128xf32>
    %31 = vector.shape_cast %28 : vector<8x128xf32> to vector<1x1x8x128xf32>
    tpu.vector_store %arg8[%c0_15, %c0_16, %c0_17, %c0_18], %31 {strides = array<i32>} : memref<1x13x8x128xf32, #tpu.memory_space<vmem>>, vector<1x1x8x128xf32>,
    %32 = arith.mulf %23, %6 : vector<8x128xf32>
    %c0_19 = arith.constant 0 : index
    %c1 = arith.constant 1 : index
    %c0_20 = arith.constant 0 : index
    %c0_21 = arith.constant 0 : index
    %33 = vector.load %arg8[%c0_19, %c1, %c0_20, %c0_21] : memref<1x13x8x128xf32, #tpu.memory_space<vmem>>, vector<1x1x8x128xf32>
    %34 = vector.shape_cast %33 : vector<1x1x8x128xf32> to vector<8x128xf32>
    %35 = vector.shape_cast %32 : vector<8x128xf32> to vector<1x8x128xf32>
    %cst_22 = arith.constant dense<0.000000e+00> : vector<8x128xf32>
    %36 = vector.multi_reduction <add>, %35, %cst_22 [0] : vector<1x8x128xf32> to vector<8x128xf32>
    %37 = arith.addf %34, %36 : vector<8x128xf32>
    %c0_23 = arith.constant 0 : index
    %c1_24 = arith.constant 1 : index
    %c0_25 = arith.constant 0 : index
    %c0_26 = arith.constant 0 : index
    %38 = vector.load %arg8[%c0_23, %c1_24, %c0_25, %c0_26] : memref<1x13x8x128xf32, #tpu.memory_space<vmem>>, vector<1x1x8x128xf32>
    %39 = vector.shape_cast %38 : vector<1x1x8x128xf32> to vector<8x128xf32>
    %40 = vector.shape_cast %37 : vector<8x128xf32> to vector<1x1x8x128xf32>
    tpu.vector_store %arg8[%c0_23, %c1_24, %c0_25, %c0_26], %40 {strides = array<i32>} : memref<1x13x8x128xf32, #tpu.memory_space<vmem>>, vector<1x1x8x128xf32>,
    %41 = arith.addf %23, %6 : vector<8x128xf32>
    %c0_27 = arith.constant 0 : index
    %c2 = arith.constant 2 : index
    %c0_28 = arith.constant 0 : index
    %c0_29 = arith.constant 0 : index
    %42 = vector.load %arg8[%c0_27, %c2, %c0_28, %c0_29] : memref<1x13x8x128xf32, #tpu.memory_space<vmem>>, vector<1x1x8x128xf32>
    %43 = vector.shape_cast %42 : vector<1x1x8x128xf32> to vector<8x128xf32>
    %44 = vector.shape_cast %41 : vector<8x128xf32> to vector<1x8x128xf32>
    %cst_30 = arith.constant dense<0.000000e+00> : vector<8x128xf32>
    %45 = vector.multi_reduction <add>, %44, %cst_30 [0] : vector<1x8x128xf32> to vector<8x128xf32>
    %46 = arith.addf %43, %45 : vector<8x128xf32>
    %c0_31 = arith.constant 0 : index
    %c2_32 = arith.constant 2 : index
    %c0_33 = arith.constant 0 : index
    %c0_34 = arith.constant 0 : index
    %47 = vector.load %arg8[%c0_31, %c2_32, %c0_33, %c0_34] : memref<1x13x8x128xf32, #tpu.memory_space<vmem>>, vector<1x1x8x128xf32>
    %48 = vector.shape_cast %47 : vector<1x1x8x128xf32> to vector<8x128xf32>
    %49 = vector.shape_cast %46 : vector<8x128xf32> to vector<1x1x8x128xf32>
    tpu.vector_store %arg8[%c0_31, %c2_32, %c0_33, %c0_34], %49 {strides = array<i32>} : memref<1x13x8x128xf32, #tpu.memory_space<vmem>>, vector<1x1x8x128xf32>,
    %c0_35 = arith.constant 0 : index
    %c0_36 = arith.constant 0 : index
    %c0_37 = arith.constant 0 : index
    %c0_38 = arith.constant 0 : index
    %50 = vector.load %arg4[%c0_35, %c0_36, %c0_37, %c0_38] : memref<1x2x8x128xf32, #tpu.memory_space<vmem>>, vector<1x2x8x128xf32>
    %51 = vector.shape_cast %50 : vector<1x2x8x128xf32> to vector<2x8x128xf32>
    %c0_39 = arith.constant 0 : index
    %c0_40 = arith.constant 0 : index
    %c0_41 = arith.constant 0 : index
    %c0_42 = arith.constant 0 : index
    %52 = vector.load %arg5[%c0_39, %c0_40, %c0_41, %c0_42] : memref<1x2x8x128xf32, #tpu.memory_space<vmem>>, vector<1x2x8x128xf32>
    %53 = vector.shape_cast %52 : vector<1x2x8x128xf32> to vector<2x8x128xf32>
    %54 = arith.subf %51, %53 : vector<2x8x128xf32>
    %55 = arith.mulf %54, %54 : vector<2x8x128xf32>
    %cst_43 = arith.constant dense<0.000000e+00> : vector<8x128xf32>
    %56 = vector.multi_reduction <add>, %55, %cst_43 [0] : vector<2x8x128xf32> to vector<8x128xf32>
    %c0_44 = arith.constant 0 : index
    %c3 = arith.constant 3 : index
    %c0_45 = arith.constant 0 : index
    %c0_46 = arith.constant 0 : index
    %57 = vector.load %arg8[%c0_44, %c3, %c0_45, %c0_46] : memref<1x13x8x128xf32, #tpu.memory_space<vmem>>, vector<1x1x8x128xf32>
    %58 = vector.shape_cast %57 : vector<1x1x8x128xf32> to vector<8x128xf32>
    %59 = vector.shape_cast %56 : vector<8x128xf32> to vector<1x8x128xf32>
    %cst_47 = arith.constant dense<0.000000e+00> : vector<8x128xf32>
    %60 = vector.multi_reduction <add>, %59, %cst_47 [0] : vector<1x8x128xf32> to vector<8x128xf32>
    %61 = arith.addf %58, %60 : vector<8x128xf32>
    %c0_48 = arith.constant 0 : index
    %c3_49 = arith.constant 3 : index
    %c0_50 = arith.constant 0 : index
    %c0_51 = arith.constant 0 : index
    %62 = vector.load %arg8[%c0_48, %c3_49, %c0_50, %c0_51] : memref<1x13x8x128xf32, #tpu.memory_space<vmem>>, vector<1x1x8x128xf32>
    %63 = vector.shape_cast %62 : vector<1x1x8x128xf32> to vector<8x128xf32>
    %64 = vector.shape_cast %61 : vector<8x128xf32> to vector<1x1x8x128xf32>
    tpu.vector_store %arg8[%c0_48, %c3_49, %c0_50, %c0_51], %64 {strides = array<i32>} : memref<1x13x8x128xf32, #tpu.memory_space<vmem>>, vector<1x1x8x128xf32>,
    %c0_52 = arith.constant 0 : index
    %c0_53 = arith.constant 0 : index
    %c0_54 = arith.constant 0 : index
    %65 = vector.load %arg7[%c0_52, %c0_53, %c0_54] : memref<1x8x128xi32, #tpu.memory_space<vmem>>, vector<1x8x128xi32>
    %66 = vector.shape_cast %65 : vector<1x8x128xi32> to vector<8x128xi32>
    %c0_55 = arith.constant 0 : index
    %c0_56 = arith.constant 0 : index
    %c0_57 = arith.constant 0 : index
    %c0_58 = arith.constant 0 : index
    %67 = vector.load %arg6[%c0_55, %c0_56, %c0_57, %c0_58] : memref<1x4x8x128xf32, #tpu.memory_space<vmem>>, vector<1x1x8x128xf32>
    %68 = vector.shape_cast %67 : vector<1x1x8x128xf32> to vector<8x128xf32>
    %c0_59 = arith.constant 0 : index
    %c1_60 = arith.constant 1 : index
    %c0_61 = arith.constant 0 : index
    %c0_62 = arith.constant 0 : index
    %69 = vector.load %arg6[%c0_59, %c1_60, %c0_61, %c0_62] : memref<1x4x8x128xf32, #tpu.memory_space<vmem>>, vector<1x1x8x128xf32>
    %70 = vector.shape_cast %69 : vector<1x1x8x128xf32> to vector<8x128xf32>
    %c0_63 = arith.constant 0 : index
    %c2_64 = arith.constant 2 : index
    %c0_65 = arith.constant 0 : index
    %c0_66 = arith.constant 0 : index
    %71 = vector.load %arg6[%c0_63, %c2_64, %c0_65, %c0_66] : memref<1x4x8x128xf32, #tpu.memory_space<vmem>>, vector<1x1x8x128xf32>
    %72 = vector.shape_cast %71 : vector<1x1x8x128xf32> to vector<8x128xf32>
    %c0_67 = arith.constant 0 : index
    %c3_68 = arith.constant 3 : index
    %c0_69 = arith.constant 0 : index
    %c0_70 = arith.constant 0 : index
    %73 = vector.load %arg6[%c0_67, %c3_68, %c0_69, %c0_70] : memref<1x4x8x128xf32, #tpu.memory_space<vmem>>, vector<1x1x8x128xf32>
    %74 = vector.shape_cast %73 : vector<1x1x8x128xf32> to vector<8x128xf32>
    %75 = arith.maximumf %68, %70 : vector<8x128xf32>
    %76 = arith.maximumf %75, %72 : vector<8x128xf32>
    %77 = arith.maximumf %76, %74 : vector<8x128xf32>
    %78 = arith.subf %68, %77 : vector<8x128xf32>
    %79 = math.exp %78 : vector<8x128xf32>
    %80 = arith.subf %70, %77 : vector<8x128xf32>
    %81 = math.exp %80 : vector<8x128xf32>
    %82 = arith.subf %72, %77 : vector<8x128xf32>
    %83 = math.exp %82 : vector<8x128xf32>
    %84 = arith.subf %74, %77 : vector<8x128xf32>
    %85 = math.exp %84 : vector<8x128xf32>
    %86 = arith.addf %79, %81 : vector<8x128xf32>
    %87 = arith.addf %86, %83 : vector<8x128xf32>
    %88 = arith.addf %87, %85 : vector<8x128xf32>
    %cst_71 = arith.constant 1.000000e+00 : f32
    %89 = vector.broadcast %cst_71 : f32 to vector<8x128xf32>
    %90 = arith.divf %89, %88 : vector<8x128xf32>
    %91 = math.log %88 : vector<8x128xf32>
    %92 = arith.addf %91, %77 : vector<8x128xf32>
    %c0_i32_72 = arith.constant 0 : i32
    %93 = vector.broadcast %c0_i32_72 : i32 to vector<8x128xi32>
    %94 = arith.cmpi eq, %66, %93 : vector<8x128xi32>
    %c1_i32 = arith.constant 1 : i32
    %95 = vector.broadcast %c1_i32 : i32 to vector<8x128xi32>
    %96 = arith.cmpi eq, %66, %95 : vector<8x128xi32>
    %c2_i32 = arith.constant 2 : i32
    %97 = vector.broadcast %c2_i32 : i32 to vector<8x128xi32>
    %98 = arith.cmpi eq, %66, %97 : vector<8x128xi32>
    %c3_i32 = arith.constant 3 : i32
    %99 = vector.broadcast %c3_i32 : i32 to vector<8x128xi32>
    %100 = arith.cmpi eq, %66, %99 : vector<8x128xi32>
    %cst_73 = arith.constant 0.000000e+00 : f32
    %101 = vector.broadcast %cst_73 : f32 to vector<8x128xf32>
    %102 = arith.select %94, %68, %101 : vector<8x128xi1>, vector<8x128xf32>
    %cst_74 = arith.constant 0.000000e+00 : f32
    %103 = vector.broadcast %cst_74 : f32 to vector<8x128xf32>
    %104 = arith.select %96, %70, %103 : vector<8x128xi1>, vector<8x128xf32>
    %105 = arith.addf %102, %104 : vector<8x128xf32>
    %cst_75 = arith.constant 0.000000e+00 : f32
    %106 = vector.broadcast %cst_75 : f32 to vector<8x128xf32>
    %107 = arith.select %98, %72, %106 : vector<8x128xi1>, vector<8x128xf32>
    %108 = arith.addf %105, %107 : vector<8x128xf32>
    %cst_76 = arith.constant 0.000000e+00 : f32
    %109 = vector.broadcast %cst_76 : f32 to vector<8x128xf32>
    %110 = arith.select %100, %74, %109 : vector<8x128xi1>, vector<8x128xf32>
    %111 = arith.addf %108, %110 : vector<8x128xf32>
    %112 = arith.subf %92, %111 : vector<8x128xf32>
    %c0_77 = arith.constant 0 : index
    %c4 = arith.constant 4 : index
    %c0_78 = arith.constant 0 : index
    %c0_79 = arith.constant 0 : index
    %113 = vector.load %arg8[%c0_77, %c4, %c0_78, %c0_79] : memref<1x13x8x128xf32, #tpu.memory_space<vmem>>, vector<1x1x8x128xf32>
    %114 = vector.shape_cast %113 : vector<1x1x8x128xf32> to vector<8x128xf32>
    %115 = vector.shape_cast %112 : vector<8x128xf32> to vector<1x8x128xf32>
    %cst_80 = arith.constant dense<0.000000e+00> : vector<8x128xf32>
    %116 = vector.multi_reduction <add>, %115, %cst_80 [0] : vector<1x8x128xf32> to vector<8x128xf32>
    %117 = arith.addf %114, %116 : vector<8x128xf32>
    %c0_81 = arith.constant 0 : index
    %c4_82 = arith.constant 4 : index
    %c0_83 = arith.constant 0 : index
    %c0_84 = arith.constant 0 : index
    %118 = vector.load %arg8[%c0_81, %c4_82, %c0_83, %c0_84] : memref<1x13x8x128xf32, #tpu.memory_space<vmem>>, vector<1x1x8x128xf32>
    %119 = vector.shape_cast %118 : vector<1x1x8x128xf32> to vector<8x128xf32>
    %120 = vector.shape_cast %117 : vector<8x128xf32> to vector<1x1x8x128xf32>
    tpu.vector_store %arg8[%c0_81, %c4_82, %c0_83, %c0_84], %120 {strides = array<i32>} : memref<1x13x8x128xf32, #tpu.memory_space<vmem>>, vector<1x1x8x128xf32>,
    %121 = arith.mulf %79, %90 : vector<8x128xf32>
    %122 = arith.extui %94 : vector<8x128xi1> to vector<8x128xi32>
    %123 = arith.sitofp %122 : vector<8x128xi32> to vector<8x128xf32>
    %cst_85 = arith.constant 0.000000e+00 : f32
    %124 = vector.broadcast %cst_85 : f32 to vector<8x128xf32>
    %125 = arith.select %94, %121, %124 : vector<8x128xi1>, vector<8x128xf32>
    %c0_86 = arith.constant 0 : index
    %c5 = arith.constant 5 : index
    %c0_87 = arith.constant 0 : index
    %c0_88 = arith.constant 0 : index
    %126 = vector.load %arg8[%c0_86, %c5, %c0_87, %c0_88] : memref<1x13x8x128xf32, #tpu.memory_space<vmem>>, vector<1x1x8x128xf32>
    %127 = vector.shape_cast %126 : vector<1x1x8x128xf32> to vector<8x128xf32>
    %128 = vector.shape_cast %125 : vector<8x128xf32> to vector<1x8x128xf32>
    %cst_89 = arith.constant dense<0.000000e+00> : vector<8x128xf32>
    %129 = vector.multi_reduction <add>, %128, %cst_89 [0] : vector<1x8x128xf32> to vector<8x128xf32>
    %130 = arith.addf %127, %129 : vector<8x128xf32>
    %c0_90 = arith.constant 0 : index
    %c5_91 = arith.constant 5 : index
    %c0_92 = arith.constant 0 : index
    %c0_93 = arith.constant 0 : index
    %131 = vector.load %arg8[%c0_90, %c5_91, %c0_92, %c0_93] : memref<1x13x8x128xf32, #tpu.memory_space<vmem>>, vector<1x1x8x128xf32>
    %132 = vector.shape_cast %131 : vector<1x1x8x128xf32> to vector<8x128xf32>
    %133 = vector.shape_cast %130 : vector<8x128xf32> to vector<1x1x8x128xf32>
    tpu.vector_store %arg8[%c0_90, %c5_91, %c0_92, %c0_93], %133 {strides = array<i32>} : memref<1x13x8x128xf32, #tpu.memory_space<vmem>>, vector<1x1x8x128xf32>,
    %134 = arith.addf %121, %123 : vector<8x128xf32>
    %c0_94 = arith.constant 0 : index
    %c9 = arith.constant 9 : index
    %c0_95 = arith.constant 0 : index
    %c0_96 = arith.constant 0 : index
    %135 = vector.load %arg8[%c0_94, %c9, %c0_95, %c0_96] : memref<1x13x8x128xf32, #tpu.memory_space<vmem>>, vector<1x1x8x128xf32>
    %136 = vector.shape_cast %135 : vector<1x1x8x128xf32> to vector<8x128xf32>
    %137 = vector.shape_cast %134 : vector<8x128xf32> to vector<1x8x128xf32>
    %cst_97 = arith.constant dense<0.000000e+00> : vector<8x128xf32>
    %138 = vector.multi_reduction <add>, %137, %cst_97 [0] : vector<1x8x128xf32> to vector<8x128xf32>
    %139 = arith.addf %136, %138 : vector<8x128xf32>
    %c0_98 = arith.constant 0 : index
    %c9_99 = arith.constant 9 : index
    %c0_100 = arith.constant 0 : index
    %c0_101 = arith.constant 0 : index
    %140 = vector.load %arg8[%c0_98, %c9_99, %c0_100, %c0_101] : memref<1x13x8x128xf32, #tpu.memory_space<vmem>>, vector<1x1x8x128xf32>
    %141 = vector.shape_cast %140 : vector<1x1x8x128xf32> to vector<8x128xf32>
    %142 = vector.shape_cast %139 : vector<8x128xf32> to vector<1x1x8x128xf32>
    tpu.vector_store %arg8[%c0_98, %c9_99, %c0_100, %c0_101], %142 {strides = array<i32>} : memref<1x13x8x128xf32, #tpu.memory_space<vmem>>, vector<1x1x8x128xf32>,
    %143 = arith.mulf %81, %90 : vector<8x128xf32>
    %144 = arith.extui %96 : vector<8x128xi1> to vector<8x128xi32>
    %145 = arith.sitofp %144 : vector<8x128xi32> to vector<8x128xf32>
    %cst_102 = arith.constant 0.000000e+00 : f32
    %146 = vector.broadcast %cst_102 : f32 to vector<8x128xf32>
    %147 = arith.select %96, %143, %146 : vector<8x128xi1>, vector<8x128xf32>
    %c0_103 = arith.constant 0 : index
    %c6 = arith.constant 6 : index
    %c0_104 = arith.constant 0 : index
    %c0_105 = arith.constant 0 : index
    %148 = vector.load %arg8[%c0_103, %c6, %c0_104, %c0_105] : memref<1x13x8x128xf32, #tpu.memory_space<vmem>>, vector<1x1x8x128xf32>
    %149 = vector.shape_cast %148 : vector<1x1x8x128xf32> to vector<8x128xf32>
    %150 = vector.shape_cast %147 : vector<8x128xf32> to vector<1x8x128xf32>
    %cst_106 = arith.constant dense<0.000000e+00> : vector<8x128xf32>
    %151 = vector.multi_reduction <add>, %150, %cst_106 [0] : vector<1x8x128xf32> to vector<8x128xf32>
    %152 = arith.addf %149, %151 : vector<8x128xf32>
    %c0_107 = arith.constant 0 : index
    %c6_108 = arith.constant 6 : index
    %c0_109 = arith.constant 0 : index
    %c0_110 = arith.constant 0 : index
    %153 = vector.load %arg8[%c0_107, %c6_108, %c0_109, %c0_110] : memref<1x13x8x128xf32, #tpu.memory_space<vmem>>, vector<1x1x8x128xf32>
    %154 = vector.shape_cast %153 : vector<1x1x8x128xf32> to vector<8x128xf32>
    %155 = vector.shape_cast %152 : vector<8x128xf32> to vector<1x1x8x128xf32>
    tpu.vector_store %arg8[%c0_107, %c6_108, %c0_109, %c0_110], %155 {strides = array<i32>} : memref<1x13x8x128xf32, #tpu.memory_space<vmem>>, vector<1x1x8x128xf32>,
    %156 = arith.addf %143, %145 : vector<8x128xf32>
    %c0_111 = arith.constant 0 : index
    %c10 = arith.constant 10 : index
    %c0_112 = arith.constant 0 : index
    %c0_113 = arith.constant 0 : index
    %157 = vector.load %arg8[%c0_111, %c10, %c0_112, %c0_113] : memref<1x13x8x128xf32, #tpu.memory_space<vmem>>, vector<1x1x8x128xf32>
    %158 = vector.shape_cast %157 : vector<1x1x8x128xf32> to vector<8x128xf32>
    %159 = vector.shape_cast %156 : vector<8x128xf32> to vector<1x8x128xf32>
    %cst_114 = arith.constant dense<0.000000e+00> : vector<8x128xf32>
    %160 = vector.multi_reduction <add>, %159, %cst_114 [0] : vector<1x8x128xf32> to vector<8x128xf32>
    %161 = arith.addf %158, %160 : vector<8x128xf32>
    %c0_115 = arith.constant 0 : index
    %c10_116 = arith.constant 10 : index
    %c0_117 = arith.constant 0 : index
    %c0_118 = arith.constant 0 : index
    %162 = vector.load %arg8[%c0_115, %c10_116, %c0_117, %c0_118] : memref<1x13x8x128xf32, #tpu.memory_space<vmem>>, vector<1x1x8x128xf32>
    %163 = vector.shape_cast %162 : vector<1x1x8x128xf32> to vector<8x128xf32>
    %164 = vector.shape_cast %161 : vector<8x128xf32> to vector<1x1x8x128xf32>
    tpu.vector_store %arg8[%c0_115, %c10_116, %c0_117, %c0_118], %164 {strides = array<i32>} : memref<1x13x8x128xf32, #tpu.memory_space<vmem>>, vector<1x1x8x128xf32>,
    %165 = arith.mulf %83, %90 : vector<8x128xf32>
    %166 = arith.extui %98 : vector<8x128xi1> to vector<8x128xi32>
    %167 = arith.sitofp %166 : vector<8x128xi32> to vector<8x128xf32>
    %cst_119 = arith.constant 0.000000e+00 : f32
    %168 = vector.broadcast %cst_119 : f32 to vector<8x128xf32>
    %169 = arith.select %98, %165, %168 : vector<8x128xi1>, vector<8x128xf32>
    %c0_120 = arith.constant 0 : index
    %c7 = arith.constant 7 : index
    %c0_121 = arith.constant 0 : index
    %c0_122 = arith.constant 0 : index
    %170 = vector.load %arg8[%c0_120, %c7, %c0_121, %c0_122] : memref<1x13x8x128xf32, #tpu.memory_space<vmem>>, vector<1x1x8x128xf32>
    %171 = vector.shape_cast %170 : vector<1x1x8x128xf32> to vector<8x128xf32>
    %172 = vector.shape_cast %169 : vector<8x128xf32> to vector<1x8x128xf32>
    %cst_123 = arith.constant dense<0.000000e+00> : vector<8x128xf32>
    %173 = vector.multi_reduction <add>, %172, %cst_123 [0] : vector<1x8x128xf32> to vector<8x128xf32>
    %174 = arith.addf %171, %173 : vector<8x128xf32>
    %c0_124 = arith.constant 0 : index
    %c7_125 = arith.constant 7 : index
    %c0_126 = arith.constant 0 : index
    %c0_127 = arith.constant 0 : index
    %175 = vector.load %arg8[%c0_124, %c7_125, %c0_126, %c0_127] : memref<1x13x8x128xf32, #tpu.memory_space<vmem>>, vector<1x1x8x128xf32>
    %176 = vector.shape_cast %175 : vector<1x1x8x128xf32> to vector<8x128xf32>
    %177 = vector.shape_cast %174 : vector<8x128xf32> to vector<1x1x8x128xf32>
    tpu.vector_store %arg8[%c0_124, %c7_125, %c0_126, %c0_127], %177 {strides = array<i32>} : memref<1x13x8x128xf32, #tpu.memory_space<vmem>>, vector<1x1x8x128xf32>,
    %178 = arith.addf %165, %167 : vector<8x128xf32>
    %c0_128 = arith.constant 0 : index
    %c11 = arith.constant 11 : index
    %c0_129 = arith.constant 0 : index
    %c0_130 = arith.constant 0 : index
    %179 = vector.load %arg8[%c0_128, %c11, %c0_129, %c0_130] : memref<1x13x8x128xf32, #tpu.memory_space<vmem>>, vector<1x1x8x128xf32>
    %180 = vector.shape_cast %179 : vector<1x1x8x128xf32> to vector<8x128xf32>
    %181 = vector.shape_cast %178 : vector<8x128xf32> to vector<1x8x128xf32>
    %cst_131 = arith.constant dense<0.000000e+00> : vector<8x128xf32>
    %182 = vector.multi_reduction <add>, %181, %cst_131 [0] : vector<1x8x128xf32> to vector<8x128xf32>
    %183 = arith.addf %180, %182 : vector<8x128xf32>
    %c0_132 = arith.constant 0 : index
    %c11_133 = arith.constant 11 : index
    %c0_134 = arith.constant 0 : index
    %c0_135 = arith.constant 0 : index
    %184 = vector.load %arg8[%c0_132, %c11_133, %c0_134, %c0_135] : memref<1x13x8x128xf32, #tpu.memory_space<vmem>>, vector<1x1x8x128xf32>
    %185 = vector.shape_cast %184 : vector<1x1x8x128xf32> to vector<8x128xf32>
    %186 = vector.shape_cast %183 : vector<8x128xf32> to vector<1x1x8x128xf32>
    tpu.vector_store %arg8[%c0_132, %c11_133, %c0_134, %c0_135], %186 {strides = array<i32>} : memref<1x13x8x128xf32, #tpu.memory_space<vmem>>, vector<1x1x8x128xf32>,
    %187 = arith.mulf %85, %90 : vector<8x128xf32>
    %188 = arith.extui %100 : vector<8x128xi1> to vector<8x128xi32>
    %189 = arith.sitofp %188 : vector<8x128xi32> to vector<8x128xf32>
    %cst_136 = arith.constant 0.000000e+00 : f32
    %190 = vector.broadcast %cst_136 : f32 to vector<8x128xf32>
    %191 = arith.select %100, %187, %190 : vector<8x128xi1>, vector<8x128xf32>
    %c0_137 = arith.constant 0 : index
    %c8 = arith.constant 8 : index
    %c0_138 = arith.constant 0 : index
    %c0_139 = arith.constant 0 : index
    %192 = vector.load %arg8[%c0_137, %c8, %c0_138, %c0_139] : memref<1x13x8x128xf32, #tpu.memory_space<vmem>>, vector<1x1x8x128xf32>
    %193 = vector.shape_cast %192 : vector<1x1x8x128xf32> to vector<8x128xf32>
    %194 = vector.shape_cast %191 : vector<8x128xf32> to vector<1x8x128xf32>
    %cst_140 = arith.constant dense<0.000000e+00> : vector<8x128xf32>
    %195 = vector.multi_reduction <add>, %194, %cst_140 [0] : vector<1x8x128xf32> to vector<8x128xf32>
    %196 = arith.addf %193, %195 : vector<8x128xf32>
    %c0_141 = arith.constant 0 : index
    %c8_142 = arith.constant 8 : index
    %c0_143 = arith.constant 0 : index
    %c0_144 = arith.constant 0 : index
    %197 = vector.load %arg8[%c0_141, %c8_142, %c0_143, %c0_144] : memref<1x13x8x128xf32, #tpu.memory_space<vmem>>, vector<1x1x8x128xf32>
    %198 = vector.shape_cast %197 : vector<1x1x8x128xf32> to vector<8x128xf32>
    %199 = vector.shape_cast %196 : vector<8x128xf32> to vector<1x1x8x128xf32>
    tpu.vector_store %arg8[%c0_141, %c8_142, %c0_143, %c0_144], %199 {strides = array<i32>} : memref<1x13x8x128xf32, #tpu.memory_space<vmem>>, vector<1x1x8x128xf32>,
    %200 = arith.addf %187, %189 : vector<8x128xf32>
    %c0_145 = arith.constant 0 : index
    %c12 = arith.constant 12 : index
    %c0_146 = arith.constant 0 : index
    %c0_147 = arith.constant 0 : index
    %201 = vector.load %arg8[%c0_145, %c12, %c0_146, %c0_147] : memref<1x13x8x128xf32, #tpu.memory_space<vmem>>, vector<1x1x8x128xf32>
    %202 = vector.shape_cast %201 : vector<1x1x8x128xf32> to vector<8x128xf32>
    %203 = vector.shape_cast %200 : vector<8x128xf32> to vector<1x8x128xf32>
    %cst_148 = arith.constant dense<0.000000e+00> : vector<8x128xf32>
    %204 = vector.multi_reduction <add>, %203, %cst_148 [0] : vector<1x8x128xf32> to vector<8x128xf32>
    %205 = arith.addf %202, %204 : vector<8x128xf32>
    %c0_149 = arith.constant 0 : index
    %c12_150 = arith.constant 12 : index
    %c0_151 = arith.constant 0 : index
    %c0_152 = arith.constant 0 : index
    %206 = vector.load %arg8[%c0_149, %c12_150, %c0_151, %c0_152] : memref<1x13x8x128xf32, #tpu.memory_space<vmem>>, vector<1x1x8x128xf32>
    %207 = vector.shape_cast %206 : vector<1x1x8x128xf32> to vector<8x128xf32>
    %208 = vector.shape_cast %205 : vector<8x128xf32> to vector<1x1x8x128xf32>
    tpu.vector_store %arg8[%c0_149, %c12_150, %c0_151, %c0_152], %208 {strides = array<i32>} : memref<1x13x8x128xf32, #tpu.memory_space<vmem>>, vector<1x1x8x128xf32>,
    return
  }
  func.func @transform_0(%arg0: i32, %arg1: i32) -> (i32, i32, i32) {
    %c0_i32 = arith.constant 0 : i32
    %c0_i32_0 = arith.constant 0 : i32
    return %arg0, %arg1, %c0_i32 : i32, i32, i32
  }
  func.func @transform_1(%arg0: i32, %arg1: i32) -> (i32, i32, i32) {
    %c0_i32 = arith.constant 0 : i32
    %c0_i32_0 = arith.constant 0 : i32
    return %arg0, %arg1, %c0_i32 : i32, i32, i32
  }
  func.func @transform_2(%arg0: i32, %arg1: i32) -> (i32, i32, i32, i32) {
    %c0_i32 = arith.constant 0 : i32
    %c0_i32_0 = arith.constant 0 : i32
    %c0_i32_1 = arith.constant 0 : i32
    return %arg0, %c0_i32, %arg1, %c0_i32_0 : i32, i32, i32, i32
  }
  func.func @transform_3(%arg0: i32, %arg1: i32) -> (i32, i32, i32, i32) {
    %c0_i32 = arith.constant 0 : i32
    %c0_i32_0 = arith.constant 0 : i32
    %c0_i32_1 = arith.constant 0 : i32
    return %arg0, %c0_i32, %arg1, %c0_i32_0 : i32, i32, i32, i32
  }
  func.func @transform_4(%arg0: i32, %arg1: i32) -> (i32, i32, i32, i32) {
    %c0_i32 = arith.constant 0 : i32
    %c0_i32_0 = arith.constant 0 : i32
    %c0_i32_1 = arith.constant 0 : i32
    return %arg0, %c0_i32, %arg1, %c0_i32_0 : i32, i32, i32, i32
  }
  func.func @transform_5(%arg0: i32, %arg1: i32) -> (i32, i32, i32) {
    %c0_i32 = arith.constant 0 : i32
    %c0_i32_0 = arith.constant 0 : i32
    return %arg0, %arg1, %c0_i32 : i32, i32, i32
  }
  func.func @transform_6(%arg0: i32, %arg1: i32) -> (i32, i32, i32, i32) {
    %c0_i32 = arith.constant 0 : i32
    %c0_i32_0 = arith.constant 0 : i32
    %c0_i32_1 = arith.constant 0 : i32
    %c0_i32_2 = arith.constant 0 : i32
    return %arg0, %c0_i32, %c0_i32_0, %c0_i32_1 : i32, i32, i32, i32
  }
}

</mosaic_0001>

<llo_original>
// kernel: tpu_custom_call.1
$region0: #{tpu_custom_call.1}
  #allocation0 [shape = 'u32[]', space=smem, size = 0x4, offset = 0x4, fixed_abs, tag = 'smem constant byte address 0x4 - core index']
  #allocation1 [shape = 'u32[144,128]{1,0:T(1,128)}', space=vmem, size = 0x12000, scoped, tag = 'internal scratch']
  %s0 = inlined_call_operand.hbm [shape: f32[2,8,128], index: 0, kind: input, shape index: {}]
  %s1 = inlined_call_operand.hbm [shape: f32[2,8,128], index: 1, kind: input, shape index: {}]
  %s2 = inlined_call_operand.hbm [shape: f32[2,2,8,128], index: 2, kind: input, shape index: {}]
  %s3 = inlined_call_operand.hbm [shape: f32[2,2,8,128], index: 3, kind: input, shape index: {}]
  %s4 = inlined_call_operand.hbm [shape: f32[2,4,8,128], index: 4, kind: input, shape index: {}]
  %s5 = inlined_call_operand.vmem [shape: s32[2,8,128], index: 5, kind: input, shape index: {}]
  %s6 = inlined_call_operand.hbm [shape: f32[2,13,8,128], index: 6, kind: output, shape index: {}]
  %s7 = sld [smem:[#allocation0]]
  $region81: #{tpu_custom_call.1} parent=0
    _
  %s9 = ssub.s32 1, %s7
  %s10 = scalar_select 0, %s9, %s7
  $region1: #{tpu_custom_call.1} parent=0
    #allocation2 [shape = 'u8[8192]{0}', space=vmem, size = 0x2000, scoped, tag = 'input window, operand 0']
    #allocation3 [shape = 's32[2]{0}', space=sflag, size = 0x8, scoped, tag = 'scoped memory for tpu_custom_call.1']
    #allocation4 [shape = 's32[2]{0}', space=sflag, size = 0x8, scoped, tag = 'scoped memory for tpu_custom_call.1']
    #allocation5 [shape = 'u8[8192]{0}', space=vmem, size = 0x2000, scoped, tag = 'input window, operand 1']
    #allocation6 [shape = 's32[2]{0}', space=sflag, size = 0x8, scoped, tag = 'scoped memory for tpu_custom_call.1']
    #allocation7 [shape = 'u8[16384]{0}', space=vmem, size = 0x4000, scoped, tag = 'input window, operand 2']
    #allocation8 [shape = 'u8[16384]{0}', space=vmem, size = 0x4000, scoped, tag = 'input window, operand 3']
    #allocation9 [shape = 's32[2]{0}', space=sflag, size = 0x8, scoped, tag = 'scoped memory for tpu_custom_call.1']
    #allocation10 [shape = 'u8[32768]{0}', space=vmem, size = 0x8000, scoped, tag = 'input window, operand 4']
    #allocation11 [shape = 'u8[106496]{0}', space=vmem, size = 0x1a000, scoped, tag = 'output window, operand 0']
    %11 = vsyncpa [#allocation3], 0
    %s12 = scalar_lea.sflag [#allocation3], 1
    %13 = vsyncpa %s12, 0
    %14 = vsyncpa [#allocation6], 0
    %s15 = scalar_lea.sflag [#allocation6], 1
    %16 = vsyncpa %s15, 0
    %17 = vsyncpa [#allocation9], 0
    %s18 = scalar_lea.sflag [#allocation9], 1
    %19 = vsyncpa %s18, 0
    %20 = vsyncpa [#allocation4], 0
    %s21 = scalar_lea.sflag [#allocation4], 1
    %22 = vsyncpa %s21, 0
    loop: start=0, step=1, limit=4
    $region2: #{tpu_custom_call.1} parent=1 // loop_pre_header
      _
    $region3: #{tpu_custom_call.1} parent=1 // loop_header
      %s24 = sphi 0, %s28
      %p25 = scmp.ge.s32.totalorder %s24, 4
      %s31 = sphi 0, %s43
      %s32 = sphi 0, %s39
      %s33 = sphi 0, %s31
      %s34 = sphi 0, %s32
      %s35 = sphi 0, %s33
      %s36 = sphi 0, %s34
      %s48 = sphi 0, %s50
      %s51 = sphi 0, %s48
      %s52 = sphi 0, %s51
      %s68 = sphi 0, %s52
      %s76 = sphi 0, %s78
      %s79 = sphi 0, %s76
      %s80 = sphi 0, %s79
      %s96 = sphi 0, %s80
      %s104 = sphi 0, %s106
      %s107 = sphi 0, %s104
      %s108 = sphi 0, %s107
      %s124 = sphi 0, %s108
      %s132 = sphi 0, %s134
      %s135 = sphi 0, %s132
      %s136 = sphi 0, %s135
      %s152 = sphi 0, %s136
      %s160 = sphi 0, %s162
      %s163 = sphi 0, %s160
      %s164 = sphi 0, %s163
      %s180 = sphi 0, %s164
      %s188 = sphi 0, %s190
      %s191 = sphi 0, %s188
      %s192 = sphi 0, %s191
      %s208 = sphi 0, %s192
      %s214 = sphi 0, %s216
      %s217 = sphi 0, %s214
      %s218 = sphi 0, %s217
      %s234 = sphi 0, %s218
    $region4: #{tpu_custom_call.1} parent=1 // loop_header_branch
      %27 = sbr.rel (%p25) target = $region8
    $region5: #{tpu_custom_call.1} parent=1 // loop_body
      %s29 = ssub.s32 %s24, 1
      %s30 = ssub.s32 %s24, 2
      %s37 = sadd.s32 1, %s32
      %p38 = scmp.ge.s32.totalorder %s37, 1
      %s39 = scalar_select %p38, 0, %s37
      %s40 = sadd.s32 1, %s31
      %s41 = scalar_select %p38, %s40, %s31
      %p42 = scmp.ge.s32.totalorder %s41, 2
      %s43 = scalar_select %p42, 0, %s41
      %s44 = ssub.s32 %s31, %s43
      %s45 = ssub.s32 %s32, %s39
      %s46 = sor.u32 %s44, %s45
      %p47 = scmp.eq.s32.totalorder %s46, 0
      %s49 = sadd.s32 %s48, 1
      %s50 = scalar_select %p47, %s48, %s49
      %p53 = pneg %p47
      %p54 = scmp.eq.s32.totalorder %s24, 1
      %p55 = por %p53, %p54
      %p56 = scmp.ne.s32.totalorder %s48, %s51
      %p57 = scmp.eq.s32.totalorder %s24, 0
      %p58 = por %p56, %p57
      %p59 = scmp.ne.s32.totalorder %s48, %s51
      %p60 = scmp.eq.s32.totalorder %s29, 1
      %p61 = por %p59, %p60
      %p62 = scmp.ne.s32.totalorder %s51, %s52
      %p63 = scmp.eq.s32.totalorder %s29, 0
      %p64 = por %p62, %p63
      %p65 = scmp.ne.s32.totalorder %s51, %s52
      %p66 = scmp.eq.s32.totalorder %s30, 1
      %p67 = por %p65, %p66
      %p69 = scmp.ne.s32.totalorder %s52, %s68
      %p70 = scmp.eq.s32.totalorder %s30, 0
      %p71 = por %p69, %p70
      %s72 = ssub.s32 %s31, %s43
      %s73 = ssub.s32 %s32, %s39
      %s74 = sor.u32 %s72, %s73
      %p75 = scmp.eq.s32.totalorder %s74, 0
      %s77 = sadd.s32 %s76, 1
      %s78 = scalar_select %p75, %s76, %s77
      %p81 = pneg %p75
      %p82 = scmp.eq.s32.totalorder %s24, 1
      %p83 = por %p81, %p82
      %p84 = scmp.ne.s32.totalorder %s76, %s79
      %p85 = scmp.eq.s32.totalorder %s24, 0
      %p86 = por %p84, %p85
      %p87 = scmp.ne.s32.totalorder %s76, %s79
      %p88 = scmp.eq.s32.totalorder %s29, 1
      %p89 = por %p87, %p88
      %p90 = scmp.ne.s32.totalorder %s79, %s80
      %p91 = scmp.eq.s32.totalorder %s29, 0
      %p92 = por %p90, %p91
      %p93 = scmp.ne.s32.totalorder %s79, %s80
      %p94 = scmp.eq.s32.totalorder %s30, 1
      %p95 = por %p93, %p94
      %p97 = scmp.ne.s32.totalorder %s80, %s96
      %p98 = scmp.eq.s32.totalorder %s30, 0
      %p99 = por %p97, %p98
      %s100 = ssub.s32 %s31, %s43
      %s101 = ssub.s32 %s32, %s39
      %s102 = sor.u32 %s100, %s101
      %p103 = scmp.eq.s32.totalorder %s102, 0
      %s105 = sadd.s32 %s104, 1
      %s106 = scalar_select %p103, %s104, %s105
      %p109 = pneg %p103
      %p110 = scmp.eq.s32.totalorder %s24, 1
      %p111 = por %p109, %p110
      %p112 = scmp.ne.s32.totalorder %s104, %s107
      %p113 = scmp.eq.s32.totalorder %s24, 0
      %p114 = por %p112, %p113
      %p115 = scmp.ne.s32.totalorder %s104, %s107
      %p116 = scmp.eq.s32.totalorder %s29, 1
      %p117 = por %p115, %p116
      %p118 = scmp.ne.s32.totalorder %s107, %s108
      %p119 = scmp.eq.s32.totalorder %s29, 0
      %p120 = por %p118, %p119
      %p121 = scmp.ne.s32.totalorder %s107, %s108
      %p122 = scmp.eq.s32.totalorder %s30, 1
      %p123 = por %p121, %p122
      %p125 = scmp.ne.s32.totalorder %s108, %s124
      %p126 = scmp.eq.s32.totalorder %s30, 0
      %p127 = por %p125, %p126
      %s128 = ssub.s32 %s31, %s43
      %s129 = ssub.s32 %s32, %s39
      %s130 = sor.u32 %s128, %s129
      %p131 = scmp.eq.s32.totalorder %s130, 0
      %s133 = sadd.s32 %s132, 1
      %s134 = scalar_select %p131, %s132, %s133
      %p137 = pneg %p131
      %p138 = scmp.eq.s32.totalorder %s24, 1
      %p139 = por %p137, %p138
      %p140 = scmp.ne.s32.totalorder %s132, %s135
      %p141 = scmp.eq.s32.totalorder %s24, 0
      %p142 = por %p140, %p141
      %p143 = scmp.ne.s32.totalorder %s132, %s135
      %p144 = scmp.eq.s32.totalorder %s29, 1
      %p145 = por %p143, %p144
      %p146 = scmp.ne.s32.totalorder %s135, %s136
      %p147 = scmp.eq.s32.totalorder %s29, 0
      %p148 = por %p146, %p147
      %p149 = scmp.ne.s32.totalorder %s135, %s136
      %p150 = scmp.eq.s32.totalorder %s30, 1
      %p151 = por %p149, %p150
      %p153 = scmp.ne.s32.totalorder %s136, %s152
      %p154 = scmp.eq.s32.totalorder %s30, 0
      %p155 = por %p153, %p154
      %s156 = ssub.s32 %s31, %s43
      %s157 = ssub.s32 %s32, %s39
      %s158 = sor.u32 %s156, %s157
      %p159 = scmp.eq.s32.totalorder %s158, 0
      %s161 = sadd.s32 %s160, 1
      %s162 = scalar_select %p159, %s160, %s161
      %p165 = pneg %p159
      %p166 = scmp.eq.s32.totalorder %s24, 1
      %p167 = por %p165, %p166
      %p168 = scmp.ne.s32.totalorder %s160, %s163
      %p169 = scmp.eq.s32.totalorder %s24, 0
      %p170 = por %p168, %p169
      %p171 = scmp.ne.s32.totalorder %s160, %s163
      %p172 = scmp.eq.s32.totalorder %s29, 1
      %p173 = por %p171, %p172
      %p174 = scmp.ne.s32.totalorder %s163, %s164
      %p175 = scmp.eq.s32.totalorder %s29, 0
      %p176 = por %p174, %p175
      %p177 = scmp.ne.s32.totalorder %s163, %s164
      %p178 = scmp.eq.s32.totalorder %s30, 1
      %p179 = por %p177, %p178
      %p181 = scmp.ne.s32.totalorder %s164, %s180
      %p182 = scmp.eq.s32.totalorder %s30, 0
      %p183 = por %p181, %p182
      %s184 = ssub.s32 %s31, %s43
      %s185 = ssub.s32 %s32, %s39
      %s186 = sor.u32 %s184, %s185
      %p187 = scmp.eq.s32.totalorder %s186, 0
      %s189 = sadd.s32 %s188, 1
      %s190 = scalar_select %p187, %s188, %s189
      %p193 = pneg %p187
      %p194 = scmp.eq.s32.totalorder %s24, 1
      %p195 = por %p193, %p194
      %p196 = scmp.ne.s32.totalorder %s188, %s191
      %p197 = scmp.eq.s32.totalorder %s24, 0
      %p198 = por %p196, %p197
      %p199 = scmp.ne.s32.totalorder %s188, %s191
      %p200 = scmp.eq.s32.totalorder %s29, 1
      %p201 = por %p199, %p200
      %p202 = scmp.ne.s32.totalorder %s191, %s192
      %p203 = scmp.eq.s32.totalorder %s29, 0
      %p204 = por %p202, %p203
      %p205 = scmp.ne.s32.totalorder %s191, %s192
      %p206 = scmp.eq.s32.totalorder %s30, 1
      %p207 = por %p205, %p206
      %p209 = scmp.ne.s32.totalorder %s192, %s208
      %p210 = scmp.eq.s32.totalorder %s30, 0
      %p211 = por %p209, %p210
      %s212 = ssub.s32 %s31, %s43
      %p213 = scmp.eq.s32.totalorder %s212, 0
      %s215 = sadd.s32 %s214, 1
      %s216 = scalar_select %p213, %s214, %s215
      %p219 = pneg %p213
      %p220 = scmp.eq.s32.totalorder %s24, 1
      %p221 = por %p219, %p220
      %p222 = scmp.ne.s32.totalorder %s214, %s217
      %p223 = scmp.eq.s32.totalorder %s24, 0
      %p224 = por %p222, %p223
      %p225 = scmp.ne.s32.totalorder %s214, %s217
      %p226 = scmp.eq.s32.totalorder %s29, 1
      %p227 = por %p225, %p226
      %p228 = scmp.ne.s32.totalorder %s217, %s218
      %p229 = scmp.eq.s32.totalorder %s29, 0
      %p230 = por %p228, %p229
      %p231 = scmp.ne.s32.totalorder %s217, %s218
      %p232 = scmp.eq.s32.totalorder %s30, 1
      %p233 = por %p231, %p232
      %p235 = scmp.ne.s32.totalorder %s218, %s234
      %p236 = scmp.eq.s32.totalorder %s30, 0
      %p237 = por %p235, %p236
      %p238 = scmp.le.s32.totalorder 1, %s24
      %p239 = scmp.lt.s32.totalorder %s24, 3
      %p240 = pnand %p238, %p239
      %p241 = pneg %p240
      // Predicated region
      $region9: #{tpu_custom_call.1} parent=5 // pred_check
        _
      $region10: #{tpu_custom_call.1} parent=5 // pred_check_branch
        %243 = sbr.rel (%p240) target = $region12
      $region11: #{tpu_custom_call.1} parent=5 // pred_region
        %s244 = ssub.s32 %s24, 1
      $region12: #{tpu_custom_call.1} parent=5 // pred_fallthru
        _
      %p245 = scmp.lt.s32.totalorder %s24, 2
      // Predicated region
      $region13: #{tpu_custom_call.1} parent=5 // pred_check
        %p246 = pneg %p245
      $region14: #{tpu_custom_call.1} parent=5 // pred_check_branch
        %248 = sbr.rel (%p246) target = $region16
      $region15: #{tpu_custom_call.1} parent=5 // pred_region
        // Predicated region
        $region17: #{tpu_custom_call.1} parent=15 // pred_check
          %p249 = pneg %p58
        $region18: #{tpu_custom_call.1} parent=15 // pred_check_branch
          %251 = sbr.rel (%p249) target = $region20
        $region19: #{tpu_custom_call.1} parent=15 // pred_region
          %s252 = sand.u32 %s48, 1
          %s253 = scalar_lea.sflag [#allocation3], %s252
          %s254 = sand.u32 %s48, 1
          %s255 = smul.addr %s254, 8
          %s256 = scalar_lea.vmem [#allocation2], %s255
          %s258 = ssub.s32 128, 128
          %259 = vsyncadd %s253, %s258
          %s260 = sadd.s32 %s32, %s31
          %s261 = smul.addr %s260, 128
          %s262 = scalar_lea.hbm %s0, %s261
          %s264 = sshll.u32 %s256, 4
          %s265 = int_to_ptr.vmem [resolvable:$true] %s264
          %267 = dma.hbm_to_vmem [thread:$0]  %s262, 128, %s265, %s253
        $region20: #{tpu_custom_call.1} parent=15 // pred_fallthru
          _
        // Predicated region
        $region21: #{tpu_custom_call.1} parent=15 // pred_check
          %p268 = pneg %p86
        $region22: #{tpu_custom_call.1} parent=15 // pred_check_branch
          %270 = sbr.rel (%p268) target = $region24
        $region23: #{tpu_custom_call.1} parent=15 // pred_region
          %s271 = sand.u32 %s24, 1
          %s272 = scalar_lea.sflag [#allocation6], %s271
          %s273 = sand.u32 %s76, 1
          %s274 = smul.addr %s273, 8
          %s275 = scalar_lea.vmem [#allocation5], %s274
          %s277 = ssub.s32 128, 128
          %278 = vsyncadd %s272, %s277
          %s279 = sadd.s32 %s32, %s31
          %s280 = smul.addr %s279, 128
          %s281 = scalar_lea.hbm %s1, %s280
          %s283 = sshll.u32 %s275, 4
          %s284 = int_to_ptr.vmem [resolvable:$true] %s283
          %286 = dma.hbm_to_vmem [thread:$0]  %s281, 128, %s284, %s272
        $region24: #{tpu_custom_call.1} parent=15 // pred_fallthru
          _
        // Predicated region
        $region25: #{tpu_custom_call.1} parent=15 // pred_check
          %p287 = pneg %p114
        $region26: #{tpu_custom_call.1} parent=15 // pred_check_branch
          %289 = sbr.rel (%p287) target = $region28
        $region27: #{tpu_custom_call.1} parent=15 // pred_region
          %s290 = sand.u32 %s24, 1
          %s291 = scalar_lea.sflag [#allocation6], %s290
          %s292 = sand.u32 %s104, 1
          %s293 = smul.addr %s292, 16
          %s294 = scalar_lea.vmem [#allocation7], %s293
          %s296 = ssub.s32 256, 256
          %297 = vsyncadd %s291, %s296
          %s298 = smul.addr %s31, 2
          %s299 = sadd.s32 %s32, %s298
          %s300 = smul.addr %s299, 128
          %s301 = scalar_lea.hbm %s2, %s300
          %s302 = sshll.u32 %s294, 4
          %s303 = int_to_ptr.vmem [resolvable:$true] %s302
          %308 = dma.hbm_to_vmem [thread:$0]  %s301, 256, %s303, %s291, 128, 128, 8
        $region28: #{tpu_custom_call.1} parent=15 // pred_fallthru
          _
        // Predicated region
        $region29: #{tpu_custom_call.1} parent=15 // pred_check
          %p309 = pneg %p142
        $region30: #{tpu_custom_call.1} parent=15 // pred_check_branch
          %311 = sbr.rel (%p309) target = $region32
        $region31: #{tpu_custom_call.1} parent=15 // pred_region
          %s312 = sand.u32 %s24, 1
          %s313 = scalar_lea.sflag [#allocation9], %s312
          %s314 = sand.u32 %s132, 1
          %s315 = smul.addr %s314, 16
          %s316 = scalar_lea.vmem [#allocation8], %s315
          %s318 = ssub.s32 256, 256
          %319 = vsyncadd %s313, %s318
          %s320 = smul.addr %s31, 2
          %s321 = sadd.s32 %s32, %s320
          %s322 = smul.addr %s321, 128
          %s323 = scalar_lea.hbm %s3, %s322
          %s324 = sshll.u32 %s316, 4
          %s325 = int_to_ptr.vmem [resolvable:$true] %s324
          %330 = dma.hbm_to_vmem [thread:$0]  %s323, 256, %s325, %s313, 128, 128, 8
        $region32: #{tpu_custom_call.1} parent=15 // pred_fallthru
          _
        // Predicated region
        $region33: #{tpu_custom_call.1} parent=15 // pred_check
          %p331 = pneg %p170
        $region34: #{tpu_custom_call.1} parent=15 // pred_check_branch
          %333 = sbr.rel (%p331) target = $region36
        $region35: #{tpu_custom_call.1} parent=15 // pred_region
          %s334 = sand.u32 %s24, 1
          %s335 = scalar_lea.sflag [#allocation9], %s334
          %s336 = sand.u32 %s160, 1
          %s337 = smul.addr %s336, 32
          %s338 = scalar_lea.vmem [#allocation10], %s337
          %s340 = ssub.s32 512, 512
          %341 = vsyncadd %s335, %s340
          %s342 = smul.addr %s31, 4
          %s343 = sadd.s32 %s32, %s342
          %s344 = smul.addr %s343, 128
          %s345 = scalar_lea.hbm %s4, %s344
          %s346 = sshll.u32 %s338, 4
          %s347 = int_to_ptr.vmem [resolvable:$true] %s346
          %352 = dma.hbm_to_vmem [thread:$0]  %s345, 512, %s347, %s335, 128, 128, 8
        $region36: #{tpu_custom_call.1} parent=15 // pred_fallthru
          _
        // Predicated region
        $region37: #{tpu_custom_call.1} parent=15 // pred_check
          %p353 = pneg %p198
        $region38: #{tpu_custom_call.1} parent=15 // pred_check_branch
          %355 = sbr.rel (%p353) target = $region40
        $region39: #{tpu_custom_call.1} parent=15 // pred_region
          %p356 = scmp.lt.s32.totalorder %s31, 1
          %s357 = scalar_select %p356, %s31, 1
          %p358 = scmp.lt.s32.totalorder %s32, 0
          %s359 = scalar_select %p358, %s32, 0
          %s360 = sadd.s32 %s359, %s357
          %s361 = smul.addr %s360, 8
          %s362 = scalar_lea.vmem %s5, %s361
        $region40: #{tpu_custom_call.1} parent=15 // pred_fallthru
          _
      $region16: #{tpu_custom_call.1} parent=5 // pred_fallthru
        _
      %p363 = scmp.le.s32.totalorder 1, %s24
      %p364 = scmp.lt.s32.totalorder %s24, 3
      %p365 = pnand %p363, %p364
      %p366 = pneg %p365
      // Predicated region
      $region41: #{tpu_custom_call.1} parent=5 // pred_check
        _
      $region42: #{tpu_custom_call.1} parent=5 // pred_check_branch
        %368 = sbr.rel (%p365) target = $region44
      $region43: #{tpu_custom_call.1} parent=5 // pred_region
        %s369 = ssub.s32 %s24, 1
        %s370 = sand.u32 %s51, 1
        %s371 = scalar_lea.sflag [#allocation3], %s370
        %s372 = sand.u32 %s51, 1
        %s373 = smul.addr %s372, 8
        %s374 = scalar_lea.vmem [#allocation2], %s373
        // Predicated region
        $region45: #{tpu_custom_call.1} parent=43 // pred_check
          %p375 = pneg %p64
        $region46: #{tpu_custom_call.1} parent=43 // pred_check_branch
          %377 = sbr.rel (%p375) target = $region48
        $region47: #{tpu_custom_call.1} parent=43 // pred_region
          %378 = dma.done %s371, 128
        $region48: #{tpu_custom_call.1} parent=43 // pred_fallthru
          _
        %s379 = sand.u32 %s29, 1
        %s380 = scalar_lea.sflag [#allocation6], %s379
        %s381 = sand.u32 %s79, 1
        %s382 = smul.addr %s381, 8
        %s383 = scalar_lea.vmem [#allocation5], %s382
        // Predicated region
        $region49: #{tpu_custom_call.1} parent=43 // pred_check
          %p384 = pneg %p92
        $region50: #{tpu_custom_call.1} parent=43 // pred_check_branch
          %386 = sbr.rel (%p384) target = $region52
        $region51: #{tpu_custom_call.1} parent=43 // pred_region
          %387 = dma.done %s380, 128
        $region52: #{tpu_custom_call.1} parent=43 // pred_fallthru
          _
        %s388 = sand.u32 %s29, 1
        %s389 = scalar_lea.sflag [#allocation6], %s388
        %s390 = sand.u32 %s107, 1
        %s391 = smul.addr %s390, 16
        %s392 = scalar_lea.vmem [#allocation7], %s391
        // Predicated region
        $region53: #{tpu_custom_call.1} parent=43 // pred_check
          %p393 = pneg %p120
        $region54: #{tpu_custom_call.1} parent=43 // pred_check_branch
          %395 = sbr.rel (%p393) target = $region56
        $region55: #{tpu_custom_call.1} parent=43 // pred_region
          %396 = dma.done %s389, 256
        $region56: #{tpu_custom_call.1} parent=43 // pred_fallthru
          _
        %s397 = sand.u32 %s29, 1
        %s398 = scalar_lea.sflag [#allocation9], %s397
        %s399 = sand.u32 %s135, 1
        %s400 = smul.addr %s399, 16
        %s401 = scalar_lea.vmem [#allocation8], %s400
        // Predicated region
        $region57: #{tpu_custom_call.1} parent=43 // pred_check
          %p402 = pneg %p148
        $region58: #{tpu_custom_call.1} parent=43 // pred_check_branch
          %404 = sbr.rel (%p402) target = $region60
        $region59: #{tpu_custom_call.1} parent=43 // pred_region
          %405 = dma.done %s398, 256
        $region60: #{tpu_custom_call.1} parent=43 // pred_fallthru
          _
        %s406 = sand.u32 %s29, 1
        %s407 = scalar_lea.sflag [#allocation9], %s406
        %s408 = sand.u32 %s163, 1
        %s409 = smul.addr %s408, 32
        %s410 = scalar_lea.vmem [#allocation10], %s409
        // Predicated region
        $region61: #{tpu_custom_call.1} parent=43 // pred_check
          %p411 = pneg %p176
        $region62: #{tpu_custom_call.1} parent=43 // pred_check_branch
          %413 = sbr.rel (%p411) target = $region64
        $region63: #{tpu_custom_call.1} parent=43 // pred_region
          %414 = dma.done %s407, 512
        $region64: #{tpu_custom_call.1} parent=43 // pred_fallthru
          _
        %s415 = sand.u32 %s51, 1
        %s416 = scalar_lea.sflag [#allocation3], %s415
        %s417 = sand.u32 %s51, 1
        %s418 = smul.addr %s417, 8
        %s419 = scalar_lea.vmem [#allocation2], %s418
        %p420 = pneg %p64
        %p421 = pneg %p61
        %s422 = sand.u32 %s29, 1
        %s423 = scalar_lea.sflag [#allocation6], %s422
        %s424 = sand.u32 %s79, 1
        %s425 = smul.addr %s424, 8
        %s426 = scalar_lea.vmem [#allocation5], %s425
        %p427 = pneg %p92
        %p428 = pneg %p89
        %s429 = sand.u32 %s29, 1
        %s430 = scalar_lea.sflag [#allocation6], %s429
        %s431 = sand.u32 %s107, 1
        %s432 = smul.addr %s431, 16
        %s433 = scalar_lea.vmem [#allocation7], %s432
        %p434 = pneg %p120
        %p435 = pneg %p117
        %s436 = sand.u32 %s29, 1
        %s437 = scalar_lea.sflag [#allocation9], %s436
        %s438 = sand.u32 %s135, 1
        %s439 = smul.addr %s438, 16
        %s440 = scalar_lea.vmem [#allocation8], %s439
        %p441 = pneg %p148
        %p442 = pneg %p145
        %s443 = sand.u32 %s29, 1
        %s444 = scalar_lea.sflag [#allocation9], %s443
        %s445 = sand.u32 %s163, 1
        %s446 = smul.addr %s445, 32
        %s447 = scalar_lea.vmem [#allocation10], %s446
        %p448 = pneg %p176
        %p449 = pneg %p173
        %p450 = scmp.lt.s32.totalorder %s33, 1
        %s451 = scalar_select %p450, %s33, 1
        %p452 = scmp.lt.s32.totalorder %s34, 0
        %s453 = scalar_select %p452, %s34, 0
        %s454 = sadd.s32 %s453, %s451
        %s455 = smul.addr %s454, 8
        %s456 = scalar_lea.vmem %s5, %s455
        %p457 = pneg %p204
        %p458 = pneg %p201
        %p459 = pneg %p230
        %p460 = pneg %p227
        %s461 = sand.u32 %s217, 1
        %s462 = scalar_lea.sflag [#allocation4], %s461
        %s463 = sand.u32 %s217, 1
        %s464 = smul.addr %s463, 104
        %s465 = scalar_lea.vmem [#allocation11], %s464
        %p466 = scmp.lt.s32.totalorder %s33, 1
        %s467 = scalar_select %p466, %s33, 1
        %p468 = scmp.lt.s32.totalorder %s34, 0
        %s469 = scalar_select %p468, %s34, 0
        %s470 = sadd.s32 %s469, %s467
        %s471 = smul.addr %s470, 8
        %s472 = scalar_lea.vmem %s5, %s471
        %p473 = scmp.eq.s32.totalorder %s34, 0
        // Predicated region
        $region65: #{tpu_custom_call.1} parent=43 // pred_check
          %p474 = pneg %p473
        $region66: #{tpu_custom_call.1} parent=43 // pred_check_branch
          %476 = sbr.rel (%p474) target = $region68
        $region67: #{tpu_custom_call.1} parent=43 // pred_region
          %477 = vst [vmem:[%s465] sm:$0xff] 0.0
          %478 = vst [vmem:[%s465 + $0x8] sm:$0xff] 0.0
          %479 = vst [vmem:[%s465 + $0x10] sm:$0xff] 0.0
          %480 = vst [vmem:[%s465 + $0x18] sm:$0xff] 0.0
          %481 = vst [vmem:[%s465 + $0x20] sm:$0xff] 0.0
          %482 = vst [vmem:[%s465 + $0x28] sm:$0xff] 0.0
          %483 = vst [vmem:[%s465 + $0x30] sm:$0xff] 0.0
          %484 = vst [vmem:[%s465 + $0x38] sm:$0xff] 0.0
          %485 = vst [vmem:[%s465 + $0x40] sm:$0xff] 0.0
          %486 = vst [vmem:[%s465 + $0x48] sm:$0xff] 0.0
          %487 = vst [vmem:[%s465 + $0x50] sm:$0xff] 0.0
          %488 = vst [vmem:[%s465 + $0x58] sm:$0xff] 0.0
          %489 = vst [vmem:[%s465 + $0x60] sm:$0xff] 0.0
        $region68: #{tpu_custom_call.1} parent=43 // pred_fallthru
          _
        %v490 = vld [vmem:[%s374] sm:$0xff]
        %v491 = vld [vmem:[%s383] sm:$0xff]
        %v492 = vand.u32 2147483647, %v490
        %v493 = vsub.f32 0.0, %v492
        %v494 = vmul.f32 %v493, 1.442695
        %v495 = vpow.pop %v494
        %v496 = vmax.f32 %v490, 0.0
        %v497 = vmul.f32 %v490, %v491
        %v498 = vsub.f32 %v496, %v497
        %v499 = vadd.f32 %v495, 1.0
        %v500 = vlog2.pop %v499
        %v501 = vmul.f32 %v500, 0.6931472
        %v502 = vmul.f32 -0.5, %v495
        %v503 = vadd.f32 %v502, 1.0
        %v504 = vmul.f32 %v503, %v495
        %v505 = vand.u32 2147483647, %v495
        %vm506 = vcmp.lt.f32.partialorder %v505, 0.0004427343
        %v507 = vsel %vm506, %v504, %v501
        %v508 = vadd.f32 %v498, %v507
        %vm509 = vcmp.ge.f32.partialorder %v490, 0.0
        %v510 = vsel %vm509, 1.0, %v495
        %v511 = vadd.f32 %v495, 1.0
        %v512 = vrcp.pop %v511
        %v513 = vmul.f32 %v510, %v512
        %v514 = vld [vmem:[%s465] sm:$0xff]
        %v515 = vadd.f32 %v508, 0.0
        %v516 = vadd.f32 %v514, %v515
        %517 = vst [vmem:[%s465] sm:$0xff] %v516
        %v518 = vmul.f32 %v513, %v491
        %s519 = scalar_lea.vmem %s465, 8 [#allocation11]
        %v520 = vld [vmem:[%s519] sm:$0xff]
        %v521 = vadd.f32 %v518, 0.0
        %v522 = vadd.f32 %v520, %v521
        %523 = vst [vmem:[%s519] sm:$0xff] %v522
        %v524 = vadd.f32 %v513, %v491
        %s525 = scalar_lea.vmem %s465, 16 [#allocation11]
        %v526 = vld [vmem:[%s525] sm:$0xff]
        %v527 = vadd.f32 %v524, 0.0
        %v528 = vadd.f32 %v526, %v527
        %529 = vst [vmem:[%s525] sm:$0xff] %v528
        %v530 = vld [vmem:[%s392] sm:$0xff]
        %v531 = vld [vmem:[%s392 + $0x8] sm:$0xff]
        %v532 = vld [vmem:[%s401] sm:$0xff]
        %v533 = vld [vmem:[%s401 + $0x8] sm:$0xff]
        %v534 = vsub.f32 %v530, %v532
        %v535 = vsub.f32 %v531, %v533
        %v536 = vmul.f32 %v534, %v534
        %v537 = vmul.f32 %v535, %v535
        %v538 = vadd.f32 %v536, %v537
        %s539 = scalar_lea.vmem %s465, 24 [#allocation11]
        %v540 = vld [vmem:[%s539] sm:$0xff]
        %v541 = vadd.f32 %v538, 0.0
        %v542 = vadd.f32 %v540, %v541
        %543 = vst [vmem:[%s539] sm:$0xff] %v542
        %v544 = vld [vmem:[%s472] sm:$0xff]
        %v545 = vld [vmem:[%s410] sm:$0xff]
        %s546 = scalar_lea.vmem %s410, 8 [#allocation10]
        %v547 = vld [vmem:[%s546] sm:$0xff]
        %s548 = scalar_lea.vmem %s410, 16 [#allocation10]
        %v549 = vld [vmem:[%s548] sm:$0xff]
        %s550 = scalar_lea.vmem %s410, 24 [#allocation10]
        %v551 = vld [vmem:[%s550] sm:$0xff]
        %v552 = vmax.f32 %v545, %v547
        %v553 = vmax.f32 %v552, %v549
        %v554 = vmax.f32 %v553, %v551
        %v555 = vsub.f32 %v545, %v554
        %v556 = vmul.f32 %v555, 1.442695
        %v557 = vpow.pop %v556
        %v558 = vsub.f32 %v547, %v554
        %v559 = vmul.f32 %v558, 1.442695
        %v560 = vpow.pop %v559
        %v561 = vsub.f32 %v549, %v554
        %v562 = vmul.f32 %v561, 1.442695
        %v563 = vpow.pop %v562
        %v564 = vsub.f32 %v551, %v554
        %v565 = vmul.f32 %v564, 1.442695
        %v566 = vpow.pop %v565
        %v567 = vadd.f32 %v557, %v560
        %v568 = vadd.f32 %v567, %v563
        %v569 = vadd.f32 %v568, %v566
        %v570 = vrcp.pop %v569
        %v571 = vmul.f32 1.0, %v570
        %v572 = vlog2.pop %v569
        %v573 = vmul.f32 %v572, 0.6931472
        %v574 = vadd.f32 %v573, %v554
        %vm575 = vcmp.eq.s32.totalorder %v544, 0
        %vm576 = vcmp.eq.s32.totalorder %v544, 1
        %vm577 = vcmp.eq.s32.totalorder %v544, 2
        %vm578 = vcmp.eq.s32.totalorder %v544, 3
        %v579 = vsel %vm575, %v545, 0.0
        %v580 = vsel %vm576, %v547, 0.0
        %v581 = vadd.f32 %v579, %v580
        %v582 = vsel %vm577, %v549, 0.0
        %v583 = vadd.f32 %v581, %v582
        %v584 = vsel %vm578, %v551, 0.0
        %v585 = vadd.f32 %v583, %v584
        %v586 = vsub.f32 %v574, %v585
        %s587 = scalar_lea.vmem %s465, 32 [#allocation11]
        %v588 = vld [vmem:[%s587] sm:$0xff]
        %v589 = vadd.f32 %v586, 0.0
        %v590 = vadd.f32 %v588, %v589
        %591 = vst [vmem:[%s587] sm:$0xff] %v590
        %v592 = vmul.f32 %v557, %v571
        %v593 = vsel %vm575, 1, 0
        %v594 = vcvt.s32.f32 %v593
        %v595 = vsel %vm575, %v592, 0.0
        %s596 = scalar_lea.vmem %s465, 40 [#allocation11]
        %v597 = vld [vmem:[%s596] sm:$0xff]
        %v598 = vadd.f32 %v595, 0.0
        %v599 = vadd.f32 %v597, %v598
        %600 = vst [vmem:[%s596] sm:$0xff] %v599
        %v601 = vadd.f32 %v592, %v594
        %s602 = scalar_lea.vmem %s465, 72 [#allocation11]
        %v603 = vld [vmem:[%s602] sm:$0xff]
        %v604 = vadd.f32 %v601, 0.0
        %v605 = vadd.f32 %v603, %v604
        %606 = vst [vmem:[%s602] sm:$0xff] %v605
        %v607 = vmul.f32 %v560, %v571
        %v608 = vsel %vm576, 1, 0
        %v609 = vcvt.s32.f32 %v608
        %v610 = vsel %vm576, %v607, 0.0
        %s611 = scalar_lea.vmem %s465, 48 [#allocation11]
        %v612 = vld [vmem:[%s611] sm:$0xff]
        %v613 = vadd.f32 %v610, 0.0
        %v614 = vadd.f32 %v612, %v613
        %615 = vst [vmem:[%s611] sm:$0xff] %v614
        %v616 = vadd.f32 %v607, %v609
        %s617 = scalar_lea.vmem %s465, 80 [#allocation11]
        %v618 = vld [vmem:[%s617] sm:$0xff]
        %v619 = vadd.f32 %v616, 0.0
        %v620 = vadd.f32 %v618, %v619
        %621 = vst [vmem:[%s617] sm:$0xff] %v620
        %v622 = vmul.f32 %v563, %v571
        %v623 = vsel %vm577, 1, 0
        %v624 = vcvt.s32.f32 %v623
        %v625 = vsel %vm577, %v622, 0.0
        %s626 = scalar_lea.vmem %s465, 56 [#allocation11]
        %v627 = vld [vmem:[%s626] sm:$0xff]
        %v628 = vadd.f32 %v625, 0.0
        %v629 = vadd.f32 %v627, %v628
        %630 = vst [vmem:[%s626] sm:$0xff] %v629
        %v631 = vadd.f32 %v622, %v624
        %s632 = scalar_lea.vmem %s465, 88 [#allocation11]
        %v633 = vld [vmem:[%s632] sm:$0xff]
        %v634 = vadd.f32 %v631, 0.0
        %v635 = vadd.f32 %v633, %v634
        %636 = vst [vmem:[%s632] sm:$0xff] %v635
        %v637 = vmul.f32 %v566, %v571
        %v638 = vsel %vm578, 1, 0
        %v639 = vcvt.s32.f32 %v638
        %v640 = vsel %vm578, %v637, 0.0
        %s641 = scalar_lea.vmem %s465, 64 [#allocation11]
        %v642 = vld [vmem:[%s641] sm:$0xff]
        %v643 = vadd.f32 %v640, 0.0
        %v644 = vadd.f32 %v642, %v643
        %645 = vst [vmem:[%s641] sm:$0xff] %v644
        %v646 = vadd.f32 %v637, %v639
        %s647 = scalar_lea.vmem %s465, 96 [#allocation11]
        %v648 = vld [vmem:[%s647] sm:$0xff]
        %v649 = vadd.f32 %v646, 0.0
        %v650 = vadd.f32 %v648, %v649
        %651 = vst [vmem:[%s647] sm:$0xff] %v650
        %s652 = sand.u32 %s217, 1
        %s653 = scalar_lea.sflag [#allocation4], %s652
        %s654 = sand.u32 %s217, 1
        %s655 = smul.addr %s654, 104
        %s656 = scalar_lea.vmem [#allocation11], %s655
        // Predicated region
        $region69: #{tpu_custom_call.1} parent=43 // pred_check
          %p657 = pneg %p227
        $region70: #{tpu_custom_call.1} parent=43 // pred_check_branch
          %659 = sbr.rel (%p657) target = $region72
        $region71: #{tpu_custom_call.1} parent=43 // pred_region
          %s661 = ssub.s32 1664, 1664
          %662 = vsyncadd %s653, %s661
          %s663 = smul.addr %s33, 13
          %s664 = smul.addr %s663, 128
          %s665 = scalar_lea.hbm %s6, %s664
          %s666 = sshll.u32 %s656, 4
          %s667 = int_to_ptr.vmem [resolvable:$true] %s666
          %672 = dma.vmem_to_hbm [thread:$0]  %s667, 1664, %s665, %s653, 128, 128, 8
        $region72: #{tpu_custom_call.1} parent=43 // pred_fallthru
          _
      $region44: #{tpu_custom_call.1} parent=5 // pred_fallthru
        _
      %p673 = scmp.le.s32.totalorder 2, %s24
      // Predicated region
      $region73: #{tpu_custom_call.1} parent=5 // pred_check
        %p674 = pneg %p673
      $region74: #{tpu_custom_call.1} parent=5 // pred_check_branch
        %676 = sbr.rel (%p674) target = $region76
      $region75: #{tpu_custom_call.1} parent=5 // pred_region
        %s677 = ssub.s32 %s24, 2
        // Predicated region
        $region77: #{tpu_custom_call.1} parent=75 // pred_check
          %p678 = pneg %p233
        $region78: #{tpu_custom_call.1} parent=75 // pred_check_branch
          %680 = sbr.rel (%p678) target = $region80
        $region79: #{tpu_custom_call.1} parent=75 // pred_region
          %s681 = sand.u32 %s218, 1
          %s682 = scalar_lea.sflag [#allocation4], %s681
          %s683 = sand.u32 %s218, 1
          %s684 = smul.addr %s683, 104
          %s685 = scalar_lea.vmem [#allocation11], %s684
          %686 = dma.done %s682, 1664
        $region80: #{tpu_custom_call.1} parent=75 // pred_fallthru
          _
      $region76: #{tpu_custom_call.1} parent=5 // pred_fallthru
        _
    $region6: #{tpu_custom_call.1} parent=1 // loop_footer
      %s28 = sadd.s32 1, %s24
    $region7: #{tpu_custom_call.1} parent=1 // loop_footer_branch
      %23 = sbr.rel target = $region3
    $region8: #{tpu_custom_call.1} parent=1 // loop_exit
      _
    %687 = vsyncpa [#allocation3], 1
    %s688 = scalar_lea.sflag [#allocation3], 1
    %689 = vsyncpa %s688, 1
    %690 = vsyncpa [#allocation6], 1
    %s691 = scalar_lea.sflag [#allocation6], 1
    %692 = vsyncpa %s691, 1
    %693 = vsyncpa [#allocation9], 1
    %s694 = scalar_lea.sflag [#allocation9], 1
    %695 = vsyncpa %s694, 1
    %696 = vsyncpa [#allocation4], 1
    %s697 = scalar_lea.sflag [#allocation4], 1
    %698 = vsyncpa %s697, 1

</llo_original>
